<compile_context>
chip_gen: v7x
topology: tpu7x:2x2x1
jax: 0.10.0
libtpu: 0.0.40
codegen_flags: <defaults>
</compile_context>

<pallas_src>
import math
import functools

import jax
import jax.numpy as jnp
from jax.experimental import pallas as pl
from jax.experimental.pallas import tpu as pltpu

# ----- "config" values (synthetic, deterministic) -----
MAX_LEN = 64
EMBED_SIZE = 32
DROPOUT_P = 0.1


def make_pe_table(max_len: int, embed_size: int):
    """Sinusoidal positional-encoding buffer, shape (max_len, 1, embed) like the PyTorch module."""
    position = jnp.arange(max_len, dtype=jnp.float32)[:, None]                      # (L, 1)
    div_term = jnp.exp(
        jnp.arange(0, embed_size, 2, dtype=jnp.float32) * (-math.log(10000.0) / embed_size)
    )                                                                                # (E/2,)
    ang = position * div_term                                                        # (L, E/2)
    pe = jnp.zeros((max_len, embed_size), dtype=jnp.float32)
    pe = pe.at[:, 0::2].set(jnp.sin(ang))
    pe = pe.at[:, 1::2].set(jnp.cos(ang))
    return pe[:, None, :]                                                            # (L, 1, E) f32


# ----------------------------- kernels -----------------------------

def _posenc_eval_kernel(x_ref, pe_ref, o_ref):
    # x block: (ts, B, E); pe block: (ts, E) f32, broadcast over the batch sublanes.
    y = x_ref[...].astype(jnp.float32) + pe_ref[...][:, None, :]
    o_ref[...] = y.astype(o_ref.dtype)


def _posenc_train_prng_kernel(x_ref, pe_ref, seed_ref, o_ref, *, keep_threshold, inv_keep):
    # Distinct, deterministic stream per seq tile: fold the grid index into the seed.
    pltpu.prng_seed(seed_ref[0] + pl.program_id(0))
    y = x_ref[...].astype(jnp.float32) + pe_ref[...][:, None, :]
    bits = pltpu.prng_random_bits(x_ref.shape)
    if bits.dtype != jnp.int32:                      # dtype of raw bits varies by version
        bits = pltpu.bitcast(bits, jnp.int32)
    # Integer-domain keep decision on the low 24 bits: keep iff bits24 < keep * 2^24.
    bits24 = jnp.bitwise_and(bits, jnp.int32((1 << 24) - 1))
    keep = bits24 < jnp.int32(keep_threshold)
    o_ref[...] = jnp.where(keep, y * inv_keep, 0.0).astype(o_ref.dtype)


def _posenc_train_bits_kernel(x_ref, pe_ref, bits_ref, o_ref, *, keep_threshold, inv_keep):
    # Fallback path: uint8 bits streamed from HBM (1 B/elt); keep iff bits < keep * 256.
    y = x_ref[...].astype(jnp.float32) + pe_ref[...][:, None, :]
    keep = bits_ref[...].astype(jnp.int32) < jnp.int32(keep_threshold)
    o_ref[...] = jnp.where(keep, y * inv_keep, 0.0).astype(o_ref.dtype)


# ----------------------------- wrapper -----------------------------

def _pick_row_tile(seq: int, row_bytes: int, target_bytes: int = 1 << 20) -> int:
    """Seq-axis tile: multiple of 8 rows, ~1 MiB per x block, and >=2 tiles when possible."""
    if seq <= 8:
        return seq
    ts = max(8, min(seq, target_bytes // max(1, row_bytes)))
    ts = max(8, (ts // 8) * 8)
    # Keep at least two seq tiles when possible so v7x's two TensorCores both get work.
    half = max(8, ((seq // 2) // 8) * 8)
    return min(ts, half)


def positional_encode(x, pe, *, dropout_p: float = DROPOUT_P, training: bool = False,
                      rng_key=None, donate_x: bool = False):
    """x: (seq, batch, embed); pe: (max_len, 1, embed). Returns (seq, batch, embed)."""
    S, B, E = x.shape
    pe2 = pe[:S].reshape(S, E).astype(jnp.float32)     # keep the sin/cos table in f32

    ts = _pick_row_tile(S, B * E * x.dtype.itemsize)
    grid = (pl.cdiv(S, ts),)                           # single seq axis; batch lives in the block
    x_spec = pl.BlockSpec((ts, B, E), lambda i: (i, 0, 0))
    pe_spec = pl.BlockSpec((ts, E), lambda i: (i, 0))
    cparams = pltpu.CompilerParams(dimension_semantics=("parallel",))
    out_shape = jax.ShapeDtypeStruct((S, B, E), x.dtype)
    io_alias = {0: 0} if donate_x else {}
    out_specs = x_spec

    use_dropout = training and dropout_p > 0.0
    if not use_dropout:
        return pl.pallas_call(
            _posenc_eval_kernel,
            out_shape=out_shape,
            grid=grid,
            in_specs=[x_spec, pe_spec],
            out_specs=out_specs,
            compiler_params=cparams,
            input_output_aliases=io_alias,
        )(x, pe2)

    if dropout_p >= 1.0:                               # degenerate: everything dropped
        return jnp.zeros_like(x)
    if rng_key is None:
        rng_key = jax.random.PRNGKey(0)

    keep = 1.0 - float(dropout_p)
    inv_keep = 1.0 / keep

    # --- primary: in-kernel hardware PRNG (only a scalar seed crosses to the kernel) ---
    seed = jax.random.randint(rng_key, (1,), minval=0,
                              maxval=jnp.iinfo(jnp.int32).max, dtype=jnp.int32)
    try:
        kernel = functools.partial(_posenc_train_prng_kernel,
                                   keep_threshold=int(round(keep * (1 << 24))),
                                   inv_keep=inv_keep)
        return pl.pallas_call(
            kernel,
            out_shape=out_shape,
            grid=grid,
            in_specs=[x_spec, pe_spec,
                      pl.BlockSpec(memory_space=pltpu.MemorySpace.SMEM)],
            out_specs=out_specs,
            compiler_params=cparams,
            input_output_aliases=io_alias,
        )(x, pe2, seed)
    except Exception:
        # TODO(synk): drop this fallback once pltpu.prng_seed/prng_random_bits lower in
        # every target environment.
        pass

    # --- fallback: streamed uint8 bits (4x less random traffic than int32; p quantized to 1/256) ---
    bits = jax.random.bits(rng_key, (S, B, E), dtype=jnp.uint8)
    kernel = functools.partial(_posenc_train_bits_kernel,
                               keep_threshold=int(round(keep * 256)),
                               inv_keep=inv_keep)
    return pl.pallas_call(
        kernel,
        out_shape=out_shape,
        grid=grid,
        in_specs=[x_spec, pe_spec, x_spec],            # bits uses the same block layout as x
        out_specs=out_specs,
        compiler_params=cparams,
        input_output_aliases=io_alias,
    )(x, pe2, bits)


# ----------------------------- test -----------------------------

if __name__ == "__main__":
    key = jax.random.PRNGKey(0)
    S, B, E = 8, 2, EMBED_SIZE
    x = jax.random.normal(key, (S, B, E), dtype=jnp.float32)
    pe = make_pe_table(MAX_LEN, EMBED_SIZE)

    # Eval mode (dropout = identity): exact check against the pure-JAX reference.
    out_eval = jax.block_until_ready(positional_encode(x, pe, training=False))
    ref = x + pe[:S]
    assert out_eval.shape == (S, B, E)
    assert jnp.allclose(out_eval, ref, atol=1e-6), "eval-mode mismatch"

    # Training mode: inverted dropout. Every element is either exactly 0 (dropped)
    # or ref / keep_prob (kept); the kept fraction should be around 1 - p.
    drop_key = jax.random.PRNGKey(123)
    out_train = jax.block_until_ready(
        positional_encode(x, pe, dropout_p=DROPOUT_P, training=True, rng_key=drop_key))
    assert out_train.shape == (S, B, E)
    keep_prob = 1.0 - DROPOUT_P
    kept = jnp.isclose(out_train * keep_prob, ref, atol=1e-5)
    dropped = out_train == 0
    assert bool(jnp.all(kept | dropped)), "training-mode: element neither kept nor dropped"
    keep_frac = float(jnp.mean(kept.astype(jnp.float32)))
    assert keep_frac > 0.5, f"dropout kept fraction suspiciously low: {keep_frac}"

    print("KERNEL_OK")
</pallas_src>

<mosaic_0001>
module attributes {stable_mosaic.version = 11 : i64} {
  func.func @_posenc_eval_kernel(%arg0: i32, %arg1: memref<8x2x32xf32, #tpu.memory_space<vmem>>, %arg2: memref<8x32xf32, #tpu.memory_space<vmem>>, %arg3: memref<8x2x32xf32, #tpu.memory_space<vmem>>) attributes {dimension_semantics = [#tpu.dimension_semantics<parallel>], iteration_bounds = array<i64: 1>, scalar_prefetch = 0 : i64, scratch_operands = 0 : i64, tpu.core_type = #tpu.core_type<tc>, window_params = [{transform_indices = @transform_0, window_bounds = array<i64: 8, 2, 32>}, {transform_indices = @transform_1, window_bounds = array<i64: 8, 32>}, {transform_indices = @transform_2, window_bounds = array<i64: 8, 2, 32>}]} {
    %c0 = arith.constant 0 : index
    %c0_0 = arith.constant 0 : index
    %c0_1 = arith.constant 0 : index
    %0 = vector.load %arg1[%c0, %c0_0, %c0_1] : memref<8x2x32xf32, #tpu.memory_space<vmem>>, vector<8x2x32xf32>
    %c0_2 = arith.constant 0 : index
    %c0_3 = arith.constant 0 : index
    %1 = vector.load %arg2[%c0_2, %c0_3] : memref<8x32xf32, #tpu.memory_space<vmem>>, vector<8x32xf32>
    %2 = vector.shape_cast %1 : vector<8x32xf32> to vector<8x1x32xf32>
    %3 = vector.broadcast %2 : vector<8x1x32xf32> to vector<8x2x32xf32>
    %4 = arith.addf %0, %3 : vector<8x2x32xf32>
    %c0_4 = arith.constant 0 : index
    %c0_5 = arith.constant 0 : index
    %c0_6 = arith.constant 0 : index
    %5 = vector.load %arg3[%c0_4, %c0_5, %c0_6] : memref<8x2x32xf32, #tpu.memory_space<vmem>>, vector<8x2x32xf32>
    tpu.vector_store %arg3[%c0_4, %c0_5, %c0_6], %4 {strides = array<i32>} : memref<8x2x32xf32, #tpu.memory_space<vmem>>, vector<8x2x32xf32>,
    return
  }
  func.func @transform_0(%arg0: i32) -> (i32, i32, i32) {
    %c0_i32 = arith.constant 0 : i32
    %c0_i32_0 = arith.constant 0 : i32
    %c0_i32_1 = arith.constant 0 : i32
    return %arg0, %c0_i32, %c0_i32_0 : i32, i32, i32
  }
  func.func @transform_1(%arg0: i32) -> (i32, i32) {
    %c0_i32 = arith.constant 0 : i32
    %c0_i32_0 = arith.constant 0 : i32
    return %arg0, %c0_i32 : i32, i32
  }
  func.func @transform_2(%arg0: i32) -> (i32, i32, i32) {
    %c0_i32 = arith.constant 0 : i32
    %c0_i32_0 = arith.constant 0 : i32
    %c0_i32_1 = arith.constant 0 : i32
    return %arg0, %c0_i32, %c0_i32_0 : i32, i32, i32
  }
}

</mosaic_0001>

<llo_original>
// kernel: tpu_custom_call.1
$region0: #{tpu_custom_call.1}
  #allocation0 [shape = 'u32[]', space=smem, size = 0x4, offset = 0x4, fixed_abs, tag = 'smem constant byte address 0x4 - core index']
  #allocation1 [shape = 'u32[144,128]{1,0:T(1,128)}', space=vmem, size = 0x12000, scoped, tag = 'internal scratch']
  %s0 = inlined_call_operand.hbm [shape: f32[8,2,32], index: 0, kind: input, shape index: {}]
  %s1 = inlined_call_operand.hbm [shape: f32[8,32], index: 1, kind: input, shape index: {}]
  %s2 = inlined_call_operand.hbm [shape: f32[8,2,32], index: 2, kind: output, shape index: {}]
  %s3 = sld [smem:[#allocation0]]
  $region26: #{tpu_custom_call.1} parent=0
    _
  %s5 = ssub.s32 1, %s3
  %s6 = scalar_select 0, %s5, %s3
  $region1: #{tpu_custom_call.1} parent=0
    #allocation2 [shape = 'u8[8192]{0}', space=vmem, size = 0x2000, scoped, tag = 'input window, operand 0, single buffered']
    #allocation3 [shape = 's32[1]{0}', space=sflag, size = 0x4, scoped, tag = 'scoped memory for tpu_custom_call.1']
    #allocation4 [shape = 's32[1]{0}', space=sflag, size = 0x4, scoped, tag = 'scoped memory for tpu_custom_call.1']
    #allocation5 [shape = 'u8[4096]{0}', space=vmem, size = 0x1000, scoped, tag = 'input window, operand 1, single buffered']
    #allocation6 [shape = 's32[1]{0}', space=sflag, size = 0x4, scoped, tag = 'scoped memory for tpu_custom_call.1']
    #allocation7 [shape = 'u8[8192]{0}', space=vmem, size = 0x2000, scoped, tag = 'output window, operand 0, single buffered']
    %7 = vsyncpa [#allocation3], 0
    %8 = vsyncpa [#allocation6], 0
    %9 = vsyncpa [#allocation4], 0
    // Predicated region
    $region2: #{tpu_custom_call.1} parent=1 // pred_check
      _
    $region3: #{tpu_custom_call.1} parent=1 // pred_check_branch
      %11 = sbr.rel (0) target = $region5
    $region4: #{tpu_custom_call.1} parent=1 // pred_region
      %s13 = ssub.s32 256, 256
      %14 = vsyncadd [#allocation3], %s13
      %s15 = sshll.u32 [#allocation2], 4
      %s16 = int_to_ptr.vmem [resolvable:$true] %s15
      %21 = dma.hbm_to_vmem [thread:$0]  %s0, 256, %s16, [#allocation3], 32, 32, 2
    $region5: #{tpu_custom_call.1} parent=1 // pred_fallthru
      _
    // Predicated region
    $region6: #{tpu_custom_call.1} parent=1 // pred_check
      _
    $region7: #{tpu_custom_call.1} parent=1 // pred_check_branch
      %23 = sbr.rel (0) target = $region9
    $region8: #{tpu_custom_call.1} parent=1 // pred_region
      %s25 = ssub.s32 128, 128
      %26 = vsyncadd [#allocation6], %s25
      %s28 = sshll.u32 [#allocation5], 4
      %s29 = int_to_ptr.vmem [resolvable:$true] %s28
      %31 = dma.hbm_to_vmem [thread:$0]  %s1, 128, %s29, [#allocation6]
    $region9: #{tpu_custom_call.1} parent=1 // pred_fallthru
      _
    // Predicated region
    $region10: #{tpu_custom_call.1} parent=1 // pred_check
      _
    $region11: #{tpu_custom_call.1} parent=1 // pred_check_branch
      %33 = sbr.rel (0) target = $region13
    $region12: #{tpu_custom_call.1} parent=1 // pred_region
      %34 = dma.done [#allocation3], 256
    $region13: #{tpu_custom_call.1} parent=1 // pred_fallthru
      _
    // Predicated region
    $region14: #{tpu_custom_call.1} parent=1 // pred_check
      _
    $region15: #{tpu_custom_call.1} parent=1 // pred_check_branch
      %36 = sbr.rel (0) target = $region17
    $region16: #{tpu_custom_call.1} parent=1 // pred_region
      %37 = dma.done [#allocation6], 128
    $region17: #{tpu_custom_call.1} parent=1 // pred_fallthru
      _
    %v38 = vld [vmem:[#allocation2] sm:$0x3]
    %v39 = vld [vmem:[#allocation2 + $0x2] sm:$0x3]
    %v40 = vld [vmem:[#allocation2 + $0x4] sm:$0x3]
    %v41 = vld [vmem:[#allocation2 + $0x6] sm:$0x3]
    %v42 = vld [vmem:[#allocation2 + $0x8] sm:$0x3]
    %v43 = vld [vmem:[#allocation2 + $0xa] sm:$0x3]
    %v44 = vld [vmem:[#allocation2 + $0xc] sm:$0x3]
    %v45 = vld [vmem:[#allocation2 + $0xe] sm:$0x3]
    %v46 = vld [vmem:[#allocation5] sm:$0xff]
    %v48 = vcombine.high %v46, %v46
    %v50 = vunpack.c.l.s4 1966171168
    %v51 = vunpack.c.0.s8 %v50
    %v52 = vlaneseq
    %v53 = vshrl.u32 %v52, 7
    %v54 = vsub.s32 %v51, %v53
    %v55 = vrot.slane %v46, %v54
    %v57 = vunpack.c.l.s4 1966171168
    %v58 = vunpack.c.0.s8 %v57
    %v59 = vlaneseq
    %v60 = vshrl.u32 %v59, 7
    %v61 = vsub.s32 %v58, %v60
    %v62 = vrot.slane %v48, %v61
    %v63 = vcombine.high %v55, %v55
    %v64 = vcombine.high %v62, %v62
    %v66 = vunpack.c.l.s4 1966171168
    %v67 = vunpack.c.0.s8 %v66
    %v68 = vlaneseq
    %v69 = vshrl.u32 %v68, 7
    %v70 = vsub.s32 %v67, %v69
    %v71 = vrot.slane %v55, %v70
    %v73 = vunpack.c.l.s4 1966171168
    %v74 = vunpack.c.0.s8 %v73
    %v75 = vlaneseq
    %v76 = vshrl.u32 %v75, 7
    %v77 = vsub.s32 %v74, %v76
    %v78 = vrot.slane %v62, %v77
    %v80 = vunpack.c.l.s4 1966171168
    %v81 = vunpack.c.0.s8 %v80
    %v82 = vlaneseq
    %v83 = vshrl.u32 %v82, 7
    %v84 = vsub.s32 %v81, %v83
    %v85 = vrot.slane %v63, %v84
    %v87 = vunpack.c.l.s4 1966171168
    %v88 = vunpack.c.0.s8 %v87
    %v89 = vlaneseq
    %v90 = vshrl.u32 %v89, 7
    %v91 = vsub.s32 %v88, %v90
    %v92 = vrot.slane %v64, %v91
    %v93 = vcombine.high %v71, %v71
    %v94 = vcombine.high %v78, %v78
    %v95 = vcombine.high %v85, %v85
    %v96 = vcombine.high %v92, %v92
    %v97 = vlaneseq
    %v98 = vshrl.u32 %v97, 7
    %v99 = vsub.s32 0, %v98
    %v100 = vrot.slane %v71, %v99
    %v101 = vlaneseq
    %v102 = vshrl.u32 %v101, 7
    %v103 = vsub.s32 0, %v102
    %v104 = vrot.slane %v85, %v103
    %v105 = vlaneseq
    %v106 = vshrl.u32 %v105, 7
    %v107 = vsub.s32 0, %v106
    %v108 = vrot.slane %v93, %v107
    %v109 = vlaneseq
    %v110 = vshrl.u32 %v109, 7
    %v111 = vsub.s32 0, %v110
    %v112 = vrot.slane %v95, %v111
    %v113 = vlaneseq
    %v114 = vshrl.u32 %v113, 7
    %v115 = vsub.s32 0, %v114
    %v116 = vrot.slane %v78, %v115
    %v117 = vlaneseq
    %v118 = vshrl.u32 %v117, 7
    %v119 = vsub.s32 0, %v118
    %v120 = vrot.slane %v92, %v119
    %v121 = vlaneseq
    %v122 = vshrl.u32 %v121, 7
    %v123 = vsub.s32 0, %v122
    %v124 = vrot.slane %v94, %v123
    %v125 = vlaneseq
    %v126 = vshrl.u32 %v125, 7
    %v127 = vsub.s32 0, %v126
    %v128 = vrot.slane %v96, %v127
    %v137 = vadd.f32 %v38, %v100
    %v138 = vadd.f32 %v39, %v104
    %v139 = vadd.f32 %v40, %v108
    %v140 = vadd.f32 %v41, %v112
    %v141 = vadd.f32 %v42, %v116
    %v142 = vadd.f32 %v43, %v120
    %v143 = vadd.f32 %v44, %v124
    %v144 = vadd.f32 %v45, %v128
    %vm145 = vcmask 254976
    %146 = vst.msk [vmem:[#allocation7] sm:$0x3] %vm145, %v137
    %147 = vst.msk [vmem:[#allocation7 + $0x2] sm:$0x3] %vm145, %v138
    %148 = vst.msk [vmem:[#allocation7 + $0x4] sm:$0x3] %vm145, %v139
    %149 = vst.msk [vmem:[#allocation7 + $0x6] sm:$0x3] %vm145, %v140
    %150 = vst.msk [vmem:[#allocation7 + $0x8] sm:$0x3] %vm145, %v141
    %151 = vst.msk [vmem:[#allocation7 + $0xa] sm:$0x3] %vm145, %v142
    %152 = vst.msk [vmem:[#allocation7 + $0xc] sm:$0x3] %vm145, %v143
    %153 = vst.msk [vmem:[#allocation7 + $0xe] sm:$0x3] %vm145, %v144
    // Predicated region
    $region18: #{tpu_custom_call.1} parent=1 // pred_check
      _
    $region19: #{tpu_custom_call.1} parent=1 // pred_check_branch
      %155 = sbr.rel (0) target = $region21
    $region20: #{tpu_custom_call.1} parent=1 // pred_region
      %s157 = ssub.s32 256, 256
      %158 = vsyncadd [#allocation4], %s157
      %s159 = sshll.u32 [#allocation7], 4
      %s160 = int_to_ptr.vmem [resolvable:$true] %s159
      %165 = dma.vmem_to_hbm [thread:$0]  %s160, 256, %s2, [#allocation4], 32, 32, 2
    $region21: #{tpu_custom_call.1} parent=1 // pred_fallthru
      _
    // Predicated region
    $region22: #{tpu_custom_call.1} parent=1 // pred_check
      _
    $region23: #{tpu_custom_call.1} parent=1 // pred_check_branch
      %167 = sbr.rel (0) target = $region25
    $region24: #{tpu_custom_call.1} parent=1 // pred_region
      %168 = dma.done [#allocation4], 256
    $region25: #{tpu_custom_call.1} parent=1 // pred_fallthru
      _
    %169 = vsyncpa [#allocation3], 1
    %170 = vsyncpa [#allocation6], 1
    %171 = vsyncpa [#allocation4], 1

</llo_original>
